<compile_context>
chip_gen: v7x
topology: tpu7x:2x2x1
jax: 0.10.0
libtpu: 0.0.40
codegen_flags: <defaults>
</compile_context>

<pallas_src>
import jax
import jax.numpy as jnp
from jax.experimental import pallas as pl
from jax.experimental.pallas import tpu as pltpu


def _round_up(x: int, m: int) -> int:
    return ((x + m - 1) // m) * m


def _choose_tile_b(B: int, cap: int = 512, min_tiles: int = 2) -> int:
    """Batch tile: multiple of 8, <= cap, targeting >= min_tiles grid steps
    for large B (megacore on v7x) while keeping batch padding small."""
    cap = max(8, _round_up(cap, 8))
    k = max(min_tiles, pl.cdiv(B, cap))
    tb = _round_up(pl.cdiv(B, k), 8)
    return min(max(tb, 8), cap)


def _make_kernel(a_valid: int, a_pad: int):
    """Kernel closure over the (static) number of real / padded action columns."""

    def kernel(x_ref, w1_ref, b1_ref, w2_ref, b2_ref, o_ref):
        # fc1 (bf16 MXU inputs, f32 accumulate) + bias + ReLU in f32.
        h = jnp.dot(x_ref[...], w1_ref[...], preferred_element_type=jnp.float32)
        h = jnp.maximum(h + b1_ref[...], 0.0)

        # fc2: cast h to the weight dtype (bf16 MXU fast path), f32 accumulate.
        logits = jnp.dot(h.astype(w2_ref.dtype), w2_ref[...],
                         preferred_element_type=jnp.float32) + b2_ref[...]

        # Mask padded action lanes so softmax normalizes over real columns only.
        if a_valid < a_pad:
            col = jax.lax.broadcasted_iota(jnp.int32, logits.shape, 1)
            logits = jnp.where(col < a_valid, logits, -jnp.inf)

        # Numerically-stable softmax over the last axis (f32, lane-dense A_p).
        m = jnp.max(logits, axis=-1, keepdims=True)
        e = jnp.exp(logits - m)
        denom = jnp.sum(e, axis=-1, keepdims=True)
        probs = e * pl.reciprocal(denom)          # exact reciprocal (approx=False)

        # Store only the real action columns (narrow output -> ~16x less HBM
        # writeback; masked vst into a narrow tile is cheap vs. saved bytes).
        o_ref[...] = probs[:, :a_valid].astype(o_ref.dtype)

    return kernel


def prepare_params(w1, b1, w2, b2):
    """One-time padding/casting of parameters (outside the forward hot path).

    w1: (In, H); b1: (H,) or (1, H); w2: (H, A); b2: (A,) or (1, A).
    Weights are (in, out) — the transpose of nn.Linear's (out, in) layout.
    Padded hidden columns get 0 weight / 0 bias (exactly 0 after ReLU, so they
    contribute nothing to fc2); padded action columns are masked in-kernel.
    """
    In, H = w1.shape
    H2, A = w2.shape
    assert H2 == H
    H_p = _round_up(H, 128)
    A_p = _round_up(A, 128)

    w1_p = jnp.pad(w1.astype(jnp.bfloat16), ((0, 0), (0, H_p - H)))
    b1_p = jnp.pad(jnp.reshape(b1, (1, H)).astype(jnp.float32), ((0, 0), (0, H_p - H)))
    w2_p = jnp.pad(w2.astype(jnp.bfloat16), ((0, H_p - H), (0, A_p - A)))
    b2_p = jnp.pad(jnp.reshape(b2, (1, A)).astype(jnp.float32), ((0, 0), (0, A_p - A)))

    return {"w1": w1_p, "b1": b1_p, "w2": w2_p, "b2": b2_p,
            "in_size": In, "hidden": H, "actions": A}


def simplenet_forward(x, params, *, tile_b_cap=512, min_tiles=2):
    """x: (B, In). Returns softmax probabilities of shape (B, A) in float32."""
    B, In = x.shape
    assert In == params["in_size"]
    A = params["actions"]
    w1_p, b1_p, w2_p, b2_p = params["w1"], params["b1"], params["w2"], params["b2"]
    H_p = w1_p.shape[1]
    A_p = w2_p.shape[1]

    tb = _choose_tile_b(B, cap=tile_b_cap, min_tiles=min_tiles)
    B_p = pl.cdiv(B, tb) * tb

    x_p = x.astype(jnp.bfloat16)
    if B_p != B:
        # Small exact zero-pad (at most a few rows with padding-aware tb).
        x_p = jnp.pad(x_p, ((0, B_p - B), (0, 0)))

    grid = (B_p // tb,)
    out = pl.pallas_call(
        _make_kernel(A, A_p),
        out_shape=jax.ShapeDtypeStruct((B_p, A), jnp.float32),
        grid=grid,
        in_specs=[
            # Streamed per grid step (double-buffered by the Pallas pipeline):
            pl.BlockSpec((tb, In), lambda i: (i, 0)),       # x tile
            # Resident across the whole grid (constant block index):
            pl.BlockSpec((In, H_p), lambda i: (0, 0)),      # w1 (bf16)
            pl.BlockSpec((1, H_p), lambda i: (0, 0)),       # b1 (f32)
            pl.BlockSpec((H_p, A_p), lambda i: (0, 0)),     # w2 (bf16)
            pl.BlockSpec((1, A_p), lambda i: (0, 0)),       # b2 (f32)
        ],
        # Last block dim == full array dim (A), so the (8,128) rule is satisfied.
        out_specs=pl.BlockSpec((tb, A), lambda i: (i, 0)),
        compiler_params=pltpu.CompilerParams(
            dimension_semantics=("parallel",),              # megacore on v7x
        ),
    )(x_p, w1_p, b1_p, w2_p, b2_p)

    return out if B_p == B else out[:B]


def init_params(key, input_size, hidden_size, action_size):
    # Deterministic init mimicking nn.Linear's uniform(-1/sqrt(fan_in), 1/sqrt(fan_in)).
    k1, k2, k3, k4 = jax.random.split(key, 4)
    bound1 = 1.0 / jnp.sqrt(input_size)
    bound2 = 1.0 / jnp.sqrt(hidden_size)
    w1 = jax.random.uniform(k1, (input_size, hidden_size), jnp.float32, -bound1, bound1)
    b1 = jax.random.uniform(k2, (1, hidden_size), jnp.float32, -bound1, bound1)
    w2 = jax.random.uniform(k3, (hidden_size, action_size), jnp.float32, -bound2, bound2)
    b2 = jax.random.uniform(k4, (1, action_size), jnp.float32, -bound2, bound2)
    return w1, b1, w2, b2


def _ref_forward(x, w1, b1, w2, b2):
    # Pure-JAX reference (f32 everywhere) for correctness checking.
    xf = x.astype(jnp.float32)
    h = jnp.maximum(jnp.dot(xf, w1.astype(jnp.float32)) + b1.astype(jnp.float32), 0.0)
    logits = jnp.dot(h, w2.astype(jnp.float32)) + b2.astype(jnp.float32)
    return jax.nn.softmax(logits, axis=-1)


# TODO(synk): get_action's epsilon-greedy sampling / argmax is host-side control
# flow outside the forward pass and is intentionally not implemented as a kernel.

if __name__ == "__main__":
    batch, input_size, hidden_size, action_size = 2, 16, 32, 8

    key = jax.random.PRNGKey(0)
    kx, kp = jax.random.split(key)
    x = jax.random.normal(kx, (batch, input_size), jnp.float32)
    w1, b1, w2, b2 = init_params(kp, input_size, hidden_size, action_size)

    # bf16 for the streamed/MXU operands, f32 for biases and elementwise math.
    x_bf16 = x.astype(jnp.bfloat16)
    params = prepare_params(w1, b1, w2, b2)   # one-time pad + cast (outside forward)

    out = simplenet_forward(x_bf16, params)
    jax.block_until_ready(out)

    # sanity: shape, softmax rows sum to ~1, and close to the f32 reference
    ref = _ref_forward(x_bf16, w1.astype(jnp.bfloat16), b1, w2.astype(jnp.bfloat16), b2)
    row_sums = jnp.sum(out, axis=-1)
    assert out.shape == (batch, action_size)
    assert bool(jnp.allclose(row_sums, 1.0, atol=1e-3))
    assert bool(jnp.allclose(out, ref, atol=2e-2))

    print("KERNEL_OK")
</pallas_src>

<mosaic_0001>
module attributes {stable_mosaic.version = 11 : i64} {
  func.func @kernel(%arg0: i32, %arg1: memref<8x16xbf16, #tpu.memory_space<vmem>>, %arg2: memref<16x128xbf16, #tpu.memory_space<vmem>>, %arg3: memref<1x128xf32, #tpu.memory_space<vmem>>, %arg4: memref<128x128xbf16, #tpu.memory_space<vmem>>, %arg5: memref<1x128xf32, #tpu.memory_space<vmem>>, %arg6: memref<8x8xf32, #tpu.memory_space<vmem>>) attributes {dimension_semantics = [#tpu.dimension_semantics<parallel>], iteration_bounds = array<i64: 1>, scalar_prefetch = 0 : i64, scratch_operands = 0 : i64, tpu.core_type = #tpu.core_type<tc>, window_params = [{transform_indices = @transform_0, window_bounds = array<i64: 8, 16>}, {pipeline_mode = #tpu.pipeline_mode<synchronous>, transform_indices = @transform_1, window_bounds = array<i64: 16, 128>}, {pipeline_mode = #tpu.pipeline_mode<synchronous>, transform_indices = @transform_2, window_bounds = array<i64: 1, 128>}, {pipeline_mode = #tpu.pipeline_mode<synchronous>, transform_indices = @transform_3, window_bounds = array<i64: 128, 128>}, {pipeline_mode = #tpu.pipeline_mode<synchronous>, transform_indices = @transform_4, window_bounds = array<i64: 1, 128>}, {transform_indices = @transform_5, window_bounds = array<i64: 8, 8>}]} {
    %c0 = arith.constant 0 : index
    %c0_0 = arith.constant 0 : index
    %0 = vector.load %arg1[%c0, %c0_0] : memref<8x16xbf16, #tpu.memory_space<vmem>>, vector<8x16xbf16>
    %c0_1 = arith.constant 0 : index
    %c0_2 = arith.constant 0 : index
    %1 = vector.load %arg2[%c0_1, %c0_2] : memref<16x128xbf16, #tpu.memory_space<vmem>>, vector<16x128xbf16>
    %cst = arith.constant dense<0.000000e+00> : vector<8x128xf32>
    %2 = tpu.matmul %0, %1, %cst {dimension_numbers = #tpu.dot_dimension_numbers<[1], [0], [0], [1], [0, 0, 1, 1], [], []>} : vector<8x16xbf16>, vector<16x128xbf16>, vector<8x128xf32> -> vector<8x128xf32>
    %c0_3 = arith.constant 0 : index
    %c0_4 = arith.constant 0 : index
    %3 = vector.load %arg3[%c0_3, %c0_4] : memref<1x128xf32, #tpu.memory_space<vmem>>, vector<1x128xf32>
    %4 = vector.broadcast %3 : vector<1x128xf32> to vector<8x128xf32>
    %5 = arith.addf %2, %4 : vector<8x128xf32>
    %cst_5 = arith.constant 0.000000e+00 : f32
    %6 = vector.broadcast %cst_5 : f32 to vector<8x128xf32>
    %7 = arith.maximumf %5, %6 : vector<8x128xf32>
    %8 = arith.truncf %7 : vector<8x128xf32> to vector<8x128xbf16>
    %c0_6 = arith.constant 0 : index
    %c0_7 = arith.constant 0 : index
    %9 = vector.load %arg4[%c0_6, %c0_7] : memref<128x128xbf16, #tpu.memory_space<vmem>>, vector<128x128xbf16>
    %cst_8 = arith.constant dense<0.000000e+00> : vector<8x128xf32>
    %10 = tpu.matmul %8, %9, %cst_8 {dimension_numbers = #tpu.dot_dimension_numbers<[1], [0], [0], [1], [0, 0, 1, 1], [], []>} : vector<8x128xbf16>, vector<128x128xbf16>, vector<8x128xf32> -> vector<8x128xf32>
    %c0_9 = arith.constant 0 : index
    %c0_10 = arith.constant 0 : index
    %11 = vector.load %arg5[%c0_9, %c0_10] : memref<1x128xf32, #tpu.memory_space<vmem>>, vector<1x128xf32>
    %12 = vector.broadcast %11 : vector<1x128xf32> to vector<8x128xf32>
    %13 = arith.addf %10, %12 : vector<8x128xf32>
    %14 = tpu.iota {dimensions = array<i32: 1>} : vector<8x128xi32>
    %c8_i32 = arith.constant 8 : i32
    %15 = vector.broadcast %c8_i32 : i32 to vector<8x128xi32>
    %16 = arith.cmpi slt, %14, %15 : vector<8x128xi32>
    %cst_11 = arith.constant 0xFF800000 : f32
    %17 = vector.broadcast %cst_11 : f32 to vector<8x128xf32>
    %18 = arith.select %16, %13, %17 : vector<8x128xi1>, vector<8x128xf32>
    %cst_12 = arith.constant dense<0xFF800000> : vector<8xf32>
    %19 = vector.multi_reduction <maximumf>, %18, %cst_12 [1] : vector<8x128xf32> to vector<8xf32>
    %20 = vector.shape_cast %19 : vector<8xf32> to vector<8x1xf32>
    %21 = vector.broadcast %20 : vector<8x1xf32> to vector<8x128xf32>
    %22 = arith.subf %18, %21 : vector<8x128xf32>
    %23 = math.exp %22 : vector<8x128xf32>
    %cst_13 = arith.constant dense<0.000000e+00> : vector<8xf32>
    %24 = vector.multi_reduction <add>, %23, %cst_13 [1] : vector<8x128xf32> to vector<8xf32>
    %25 = vector.shape_cast %24 : vector<8xf32> to vector<8x1xf32>
    %26 = tpu.reciprocal %25 : vector<8x1xf32> -> vector<8x1xf32>
    %27 = vector.broadcast %26 : vector<8x1xf32> to vector<8x128xf32>
    %28 = arith.mulf %23, %27 : vector<8x128xf32>
    %29 = vector.extract_strided_slice %28 {offsets = [0, 0], sizes = [8, 8], strides = [1, 1]} : vector<8x128xf32> to vector<8x8xf32>
    %c0_14 = arith.constant 0 : index
    %c0_15 = arith.constant 0 : index
    %30 = vector.load %arg6[%c0_14, %c0_15] : memref<8x8xf32, #tpu.memory_space<vmem>>, vector<8x8xf32>
    tpu.vector_store %arg6[%c0_14, %c0_15], %29 {strides = array<i32>} : memref<8x8xf32, #tpu.memory_space<vmem>>, vector<8x8xf32>,
    return
  }
  func.func @transform_0(%arg0: i32) -> (i32, i32) {
    %c0_i32 = arith.constant 0 : i32
    %c0_i32_0 = arith.constant 0 : i32
    return %arg0, %c0_i32 : i32, i32
  }
  func.func @transform_1(%arg0: i32) -> (i32, i32) {
    %c0_i32 = arith.constant 0 : i32
    %c0_i32_0 = arith.constant 0 : i32
    %c0_i32_1 = arith.constant 0 : i32
    return %c0_i32, %c0_i32_0 : i32, i32
  }
  func.func @transform_2(%arg0: i32) -> (i32, i32) {
    %c0_i32 = arith.constant 0 : i32
    %c0_i32_0 = arith.constant 0 : i32
    %c0_i32_1 = arith.constant 0 : i32
    return %c0_i32, %c0_i32_0 : i32, i32
  }
  func.func @transform_3(%arg0: i32) -> (i32, i32) {
    %c0_i32 = arith.constant 0 : i32
    %c0_i32_0 = arith.constant 0 : i32
    %c0_i32_1 = arith.constant 0 : i32
    return %c0_i32, %c0_i32_0 : i32, i32
  }
  func.func @transform_4(%arg0: i32) -> (i32, i32) {
    %c0_i32 = arith.constant 0 : i32
    %c0_i32_0 = arith.constant 0 : i32
    %c0_i32_1 = arith.constant 0 : i32
    return %c0_i32, %c0_i32_0 : i32, i32
  }
  func.func @transform_5(%arg0: i32) -> (i32, i32) {
    %c0_i32 = arith.constant 0 : i32
    %c0_i32_0 = arith.constant 0 : i32
    return %arg0, %c0_i32 : i32, i32
  }
}

</mosaic_0001>

<llo_original>
// kernel: tpu_custom_call.1
$region0: #{tpu_custom_call.1}
  #allocation0 [shape = 'u32[]', space=smem, size = 0x4, offset = 0x4, fixed_abs, tag = 'smem constant byte address 0x4 - core index']
  #allocation1 [shape = 'u32[144,128]{1,0:T(1,128)}', space=vmem, size = 0x12000, scoped, tag = 'internal scratch']
  %s0 = inlined_call_operand.hbm [shape: bf16[8,16], index: 0, kind: input, shape index: {}]
  %s1 = inlined_call_operand.hbm [shape: bf16[16,128], index: 1, kind: input, shape index: {}]
  %s2 = inlined_call_operand.vmem [shape: f32[1,128], index: 2, kind: input, shape index: {}]
  %s3 = inlined_call_operand.hbm [shape: bf16[128,128], index: 3, kind: input, shape index: {}]
  %s4 = inlined_call_operand.vmem [shape: f32[1,128], index: 4, kind: input, shape index: {}]
  %s5 = inlined_call_operand.hbm [shape: f32[8,8], index: 5, kind: output, shape index: {}]
  %s6 = sld [smem:[#allocation0]]
  $region42: #{tpu_custom_call.1} parent=0
    _
  %s8 = ssub.s32 1, %s6
  %s9 = scalar_select 0, %s8, %s6
  $region1: #{tpu_custom_call.1} parent=0
    #allocation2 [shape = 'u8[2048]{0}', space=vmem, size = 0x800, scoped, tag = 'input window, operand 0, single buffered']
    #allocation3 [shape = 's32[1]{0}', space=sflag, size = 0x4, scoped, tag = 'scoped memory for tpu_custom_call.1']
    #allocation4 [shape = 's32[1]{0}', space=sflag, size = 0x4, scoped, tag = 'scoped memory for tpu_custom_call.1']
    #allocation5 [shape = 'u8[4096]{0}', space=vmem, size = 0x1000, scoped, tag = 'input window, operand 1, single buffered']
    #allocation6 [shape = 's32[1]{0}', space=sflag, size = 0x4, scoped, tag = 'scoped memory for tpu_custom_call.1']
    #allocation7 [shape = 'u8[32768]{0}', space=vmem, size = 0x8000, scoped, tag = 'input window, operand 3, single buffered']
    #allocation8 [shape = 'u8[4096]{0}', space=vmem, size = 0x1000, scoped, tag = 'output window, operand 0, single buffered']
    %10 = vsyncpa [#allocation3], 0
    %11 = vsyncpa [#allocation6], 0
    %12 = vsyncpa [#allocation4], 0
    // Predicated region
    $region2: #{tpu_custom_call.1} parent=1 // pred_check
      _
    $region3: #{tpu_custom_call.1} parent=1 // pred_check_branch
      %14 = sbr.rel (0) target = $region5
    $region4: #{tpu_custom_call.1} parent=1 // pred_region
      %s16 = ssub.s32 64, 64
      %17 = vsyncadd [#allocation3], %s16
      %s19 = sshll.u32 [#allocation2], 4
      %s20 = int_to_ptr.vmem [resolvable:$true] %s19
      %22 = dma.hbm_to_vmem [thread:$0]  %s0, 64, %s20, [#allocation3]
    $region5: #{tpu_custom_call.1} parent=1 // pred_fallthru
      _
    // Predicated region
    $region6: #{tpu_custom_call.1} parent=1 // pred_check
      _
    $region7: #{tpu_custom_call.1} parent=1 // pred_check_branch
      %24 = sbr.rel (0) target = $region9
    $region8: #{tpu_custom_call.1} parent=1 // pred_region
      %s26 = ssub.s32 128, 128
      %27 = vsyncadd [#allocation6], %s26
      %s28 = sshll.u32 [#allocation5], 4
      %s29 = int_to_ptr.vmem [resolvable:$true] %s28
      %34 = dma.hbm_to_vmem [thread:$0]  %s1, 128, %s29, [#allocation6], 64, 64, 4
    $region9: #{tpu_custom_call.1} parent=1 // pred_fallthru
      _
    // Predicated region
    $region10: #{tpu_custom_call.1} parent=1 // pred_check
      _
    $region11: #{tpu_custom_call.1} parent=1 // pred_check_branch
      %36 = sbr.rel (0) target = $region13
    $region12: #{tpu_custom_call.1} parent=1 // pred_region
      _
    $region13: #{tpu_custom_call.1} parent=1 // pred_fallthru
      _
    // Predicated region
    $region14: #{tpu_custom_call.1} parent=1 // pred_check
      _
    $region15: #{tpu_custom_call.1} parent=1 // pred_check_branch
      %38 = sbr.rel (0) target = $region17
    $region16: #{tpu_custom_call.1} parent=1 // pred_region
      %s40 = ssub.s32 1024, 1024
      %41 = vsyncadd [#allocation6], %s40
      %s42 = sshll.u32 [#allocation7], 4
      %s43 = int_to_ptr.vmem [resolvable:$true] %s42
      %48 = dma.hbm_to_vmem [thread:$0]  %s3, 1024, %s43, [#allocation6], 64, 64, 4
    $region17: #{tpu_custom_call.1} parent=1 // pred_fallthru
      _
    // Predicated region
    $region18: #{tpu_custom_call.1} parent=1 // pred_check
      _
    $region19: #{tpu_custom_call.1} parent=1 // pred_check_branch
      %50 = sbr.rel (0) target = $region21
    $region20: #{tpu_custom_call.1} parent=1 // pred_region
      _
    $region21: #{tpu_custom_call.1} parent=1 // pred_fallthru
      _
    // Predicated region
    $region22: #{tpu_custom_call.1} parent=1 // pred_check
      _
    $region23: #{tpu_custom_call.1} parent=1 // pred_check_branch
      %52 = sbr.rel (0) target = $region25
    $region24: #{tpu_custom_call.1} parent=1 // pred_region
      %53 = dma.done [#allocation3], 64
    $region25: #{tpu_custom_call.1} parent=1 // pred_fallthru
      _
    // Predicated region
    $region26: #{tpu_custom_call.1} parent=1 // pred_check
      _
    $region27: #{tpu_custom_call.1} parent=1 // pred_check_branch
      %55 = sbr.rel (0) target = $region29
    $region28: #{tpu_custom_call.1} parent=1 // pred_region
      %56 = dma.done [#allocation6], 128
    $region29: #{tpu_custom_call.1} parent=1 // pred_fallthru
      _
    // Predicated region
    $region30: #{tpu_custom_call.1} parent=1 // pred_check
      _
    $region31: #{tpu_custom_call.1} parent=1 // pred_check_branch
      %58 = sbr.rel (0) target = $region33
    $region32: #{tpu_custom_call.1} parent=1 // pred_region
      %59 = dma.done [#allocation6], 1024
    $region33: #{tpu_custom_call.1} parent=1 // pred_fallthru
      _
    %v61 = vld [vmem:[#allocation2] sm:$0xf]
    %v62 = vld [vmem:[#allocation5] sm:$0xf]
    %v63 = vld [vmem:[#allocation5 + $0x4] sm:$0xf]
    %v64 = vld [vmem:[%s2] sm:$0x1]
    %v66 = vlaneseq
    %v67 = vshrl.u32 %v66, 7
    %v68 = vsub.s32 0, %v67
    %v69 = vrot.slane %v64, %v68
    %v73 = vunpack.c.l.b16 %v62
    %v74 = vunpack.c.l.b16 %v63
    %v75 = vpack.c.b16 %v74, %v73
    %vm77 = vcmask 130048
    %v79 = vsel %vm77, %v61, 0
    %81 = vmatprep.subr.bf16.mxu0 0
    %82 = vmatpush1.bf16.msra.mxu0 %v75
    %83 = vmatprep.subr.bf16.mxu0 0
    %84 = vmatpush1.bf16.msra.mxu0 0
    %85 = vmatprep.subr.bf16.mxu0 0
    %86 = vmatpush1.bf16.msra.mxu0 0
    %87 = vmatprep.subr.bf16.mxu0 0
    %88 = vmatpush1.bf16.msra.mxu0 0
    %89 = vmatprep.subr.bf16.mxu0 0
    %90 = vmatpush1.bf16.msra.mxu0 0
    %91 = vmatprep.subr.bf16.mxu0 0
    %92 = vmatpush1.bf16.msra.mxu0 0
    %93 = vmatprep.subr.bf16.mxu0 0
    %94 = vmatpush1.bf16.msra.mxu0 0
    %95 = vmatprep.subr.bf16.mxu0 0
    %96 = vmatpush1.bf16.msra.mxu0 0
    %97 = vmatprep.subr.bf16.mxu0 0
    %98 = vmatpush1.bf16.msra.mxu0 0
    %99 = vmatprep.subr.bf16.mxu0 0
    %100 = vmatpush1.bf16.msra.mxu0 0
    %101 = vmatprep.subr.bf16.mxu0 0
    %102 = vmatpush1.bf16.msra.mxu0 0
    %103 = vmatprep.subr.bf16.mxu0 0
    %104 = vmatpush1.bf16.msra.mxu0 0
    %105 = vmatprep.subr.bf16.mxu0 0
    %106 = vmatpush1.bf16.msra.mxu0 0
    %107 = vmatprep.subr.bf16.mxu0 0
    %108 = vmatpush1.bf16.msra.mxu0 0
    %109 = vmatprep.subr.bf16.mxu0 0
    %110 = vmatpush1.bf16.msra.mxu0 0
    %111 = vmatprep.subr.bf16.mxu0 0
    %112 = vmatpush1.bf16.msra.mxu0 0
    %113 = vmatprep.mubr.bf16.mxu0 0
    %114 = vmatmul.mubr.bf16.gmra.mrb[0].mxu0 %v79
    %v115 = vpop.f32.mrb[0].mxu0
    %v116 = vadd.f32 %v69, %v115
    %v117 = vpop.f32.mrb[0].mxu0
    %v118 = vpop.f32.mrb[0].mxu0
    %v119 = vpop.f32.mrb[0].mxu0
    %120 = vdwg.mxu0
    %v121 = vmax.f32 %v116, 0.0
    %v122 = vpack.c.bf16 %v121, %v121
    %v123 = vld [vmem:[#allocation7] sm:$0xf]
    %v124 = vld [vmem:[#allocation7 + $0x4] sm:$0xf]
    %v125 = vld [vmem:[#allocation7 + $0x8] sm:$0xf]
    %v126 = vld [vmem:[#allocation7 + $0xc] sm:$0xf]
    %v127 = vld [vmem:[#allocation7 + $0x10] sm:$0xf]
    %v128 = vld [vmem:[#allocation7 + $0x14] sm:$0xf]
    %v129 = vld [vmem:[#allocation7 + $0x18] sm:$0xf]
    %v130 = vld [vmem:[#allocation7 + $0x1c] sm:$0xf]
    %v131 = vld [vmem:[#allocation7 + $0x20] sm:$0xf]
    %v132 = vld [vmem:[#allocation7 + $0x24] sm:$0xf]
    %v133 = vld [vmem:[#allocation7 + $0x28] sm:$0xf]
    %v134 = vld [vmem:[#allocation7 + $0x2c] sm:$0xf]
    %v135 = vld [vmem:[#allocation7 + $0x30] sm:$0xf]
    %v136 = vld [vmem:[#allocation7 + $0x34] sm:$0xf]
    %v137 = vld [vmem:[#allocation7 + $0x38] sm:$0xf]
    %v138 = vld [vmem:[#allocation7 + $0x3c] sm:$0xf]
    %v139 = vld [vmem:[%s4] sm:$0x1]
    %v141 = vlaneseq
    %v142 = vshrl.u32 %v141, 7
    %v143 = vsub.s32 0, %v142
    %v144 = vrot.slane %v139, %v143
    %v162 = vunpack.c.l.b16 %v123
    %v163 = vunpack.c.l.b16 %v124
    %v164 = vunpack.c.l.b16 %v125
    %v165 = vunpack.c.l.b16 %v126
    %v166 = vunpack.c.l.b16 %v127
    %v167 = vunpack.c.l.b16 %v128
    %v168 = vunpack.c.l.b16 %v129
    %v169 = vunpack.c.l.b16 %v130
    %v170 = vunpack.c.l.b16 %v131
    %v171 = vunpack.c.l.b16 %v132
    %v172 = vunpack.c.l.b16 %v133
    %v173 = vunpack.c.l.b16 %v134
    %v174 = vunpack.c.l.b16 %v135
    %v175 = vunpack.c.l.b16 %v136
    %v176 = vunpack.c.l.b16 %v137
    %v177 = vunpack.c.l.b16 %v138
    %v178 = vpack.c.b16 %v163, %v162
    %v179 = vpack.c.b16 %v165, %v164
    %v180 = vpack.c.b16 %v167, %v166
    %v181 = vpack.c.b16 %v169, %v168
    %v182 = vpack.c.b16 %v171, %v170
    %v183 = vpack.c.b16 %v173, %v172
    %v184 = vpack.c.b16 %v175, %v174
    %v185 = vpack.c.b16 %v177, %v176
    %194 = vmatprep.subr.bf16.mxu0 0
    %195 = vmatpush1.bf16.msra.mxu0 %v178
    %196 = vmatprep.subr.bf16.mxu0 0
    %197 = vmatpush1.bf16.msra.mxu0 %v179
    %198 = vmatprep.subr.bf16.mxu0 0
    %199 = vmatpush1.bf16.msra.mxu0 %v180
    %200 = vmatprep.subr.bf16.mxu0 0
    %201 = vmatpush1.bf16.msra.mxu0 %v181
    %202 = vmatprep.subr.bf16.mxu0 0
    %203 = vmatpush1.bf16.msra.mxu0 %v182
    %204 = vmatprep.subr.bf16.mxu0 0
    %205 = vmatpush1.bf16.msra.mxu0 %v183
    %206 = vmatprep.subr.bf16.mxu0 0
    %207 = vmatpush1.bf16.msra.mxu0 %v184
    %208 = vmatprep.subr.bf16.mxu0 0
    %209 = vmatpush1.bf16.msra.mxu0 %v185
    %210 = vmatprep.subr.bf16.mxu0 0
    %211 = vmatpush1.bf16.msra.mxu0 0
    %212 = vmatprep.subr.bf16.mxu0 0
    %213 = vmatpush1.bf16.msra.mxu0 0
    %214 = vmatprep.subr.bf16.mxu0 0
    %215 = vmatpush1.bf16.msra.mxu0 0
    %216 = vmatprep.subr.bf16.mxu0 0
    %217 = vmatpush1.bf16.msra.mxu0 0
    %218 = vmatprep.subr.bf16.mxu0 0
    %219 = vmatpush1.bf16.msra.mxu0 0
    %220 = vmatprep.subr.bf16.mxu0 0
    %221 = vmatpush1.bf16.msra.mxu0 0
    %222 = vmatprep.subr.bf16.mxu0 0
    %223 = vmatpush1.bf16.msra.mxu0 0
    %224 = vmatprep.subr.bf16.mxu0 0
    %225 = vmatpush1.bf16.msra.mxu0 0
    %226 = vmatprep.mubr.bf16.mxu0 0
    %227 = vmatmul.mubr.bf16.gmra.mrb[0].mxu0 %v122
    %v228 = vpop.f32.mrb[0].mxu0
    %v229 = vadd.f32 %v144, %v228
    %v230 = vpop.f32.mrb[0].mxu0
    %v231 = vpop.f32.mrb[0].mxu0
    %v232 = vpop.f32.mrb[0].mxu0
    %233 = vdwg.mxu0
    %v234 = vlaneseq
    %v235 = vand.u32 %v234, 127
    %vm236 = vcmp.lt.s32.totalorder %v235, 8
    %v237 = vsel %vm236, %v229, -inf
    %238 = vmax.xlane.f32.xlu0 %v237
    %v239 = vpop.xlane.xlu0 %238
    %v240 = vsub.f32 %v237, %v239
    %v241 = vmul.f32 %v240, 1.442695
    %v242 = vpow.pop %v241
    %243 = vadd.xlane.f32.xlu0 %v242
    %v244 = vpop.xlane.xlu0 %243
    %v245 = vrcp.pop %v244
    %v246 = vmul.f32 %v242, %v245
    %vm247 = vcmask 64512
    %248 = vst.msk [vmem:[#allocation8] sm:$0xff] %vm247, %v246
    // Predicated region
    $region34: #{tpu_custom_call.1} parent=1 // pred_check
      _
    $region35: #{tpu_custom_call.1} parent=1 // pred_check_branch
      %250 = sbr.rel (0) target = $region37
    $region36: #{tpu_custom_call.1} parent=1 // pred_region
      %s252 = ssub.s32 128, 128
      %253 = vsyncadd [#allocation4], %s252
      %s255 = sshll.u32 [#allocation8], 4
      %s256 = int_to_ptr.vmem [resolvable:$true] %s255
      %258 = dma.vmem_to_hbm [thread:$0]  %s256, 128, %s5, [#allocation4]
    $region37: #{tpu_custom_call.1} parent=1 // pred_fallthru
      _
    // Predicated region
    $region38: #{tpu_custom_call.1} parent=1 // pred_check
      _
    $region39: #{tpu_custom_call.1} parent=1 // pred_check_branch
      %260 = sbr.rel (0) target = $region41
    $region40: #{tpu_custom_call.1} parent=1 // pred_region
      %261 = dma.done [#allocation4], 128
    $region41: #{tpu_custom_call.1} parent=1 // pred_fallthru
      _
    %262 = vsyncpa [#allocation3], 1
    %263 = vsyncpa [#allocation6], 1
    %264 = vsyncpa [#allocation4], 1

</llo_original>
